<compile_context>
chip_gen: v7x
topology: tpu7x:2x2x1
jax: 0.10.0
libtpu: 0.0.40
codegen_flags: <defaults>
</compile_context>

<pallas_src>
import math

import jax
import jax.numpy as jnp
from jax.experimental import pallas as pl
from jax.experimental.pallas import tpu as pltpu


LANE = 128
MAX_LANE_W = 8192        # cap on column width (keeps the minimum tile modest)
ROW_ALIGN = 32           # row-tile alignment safe for f32 / bf16 / int8 packing


def _target_tile_bytes() -> int:
    """Generation-aware output-tile size for the copy kernel.

    With the direct HBM -> output-block DMA only the OUTPUT is double-buffered,
    so VMEM footprint ~= 2 * tile.  4 MiB tiles (8 MiB VMEM) are safe under
    v5e's 16 MiB default scoped VMEM; v6e / v7x amortize the ~0.35 us per-step
    overhead better with 8 MiB tiles (16 MiB VMEM, covered by the explicit
    vmem_limit_bytes below and well under physical VMEM on every generation).
    """
    try:
        kind = jax.devices()[0].device_kind.lower()
    except Exception:
        kind = ""
    if "v6" in kind or "v7" in kind:
        return 8 * 1024 * 1024
    return 4 * 1024 * 1024


def _make_copy_kernel(rows: int, tile_rows: int):
    """Kernel: DMA one row-tile of the HBM input straight into the output block."""
    rem = rows % tile_rows  # static remainder of the last grid step (0 if exact)

    def kernel(x_hbm, o_ref, sem):
        i = pl.program_id(0)
        start = i * tile_rows
        if tile_rows % ROW_ALIGN == 0:
            start = pl.multiple_of(start, ROW_ALIGN)

        def dma(n):
            cp = pltpu.make_async_copy(
                x_hbm.at[pl.ds(start, n), :],
                o_ref.at[pl.ds(0, n), :],
                sem,
            )
            cp.start()
            cp.wait()

        if rem == 0:
            dma(tile_rows)
        else:
            last = pl.num_programs(0) - 1

            @pl.when(i != last)
            def _():
                dma(tile_rows)

            @pl.when(i == last)
            def _():
                dma(rem)

    return kernel


def _pallas_copy_2d(x2d: jax.Array, *, target_tile_bytes: int | None = None) -> jax.Array:
    """Materialized copy of a (rows, cols) lane-dense slab via direct-DMA Pallas."""
    rows, cols = x2d.shape
    itemsize = jnp.dtype(x2d.dtype).itemsize
    row_bytes = cols * itemsize
    target = target_tile_bytes if target_tile_bytes is not None else _target_tile_bytes()

    tile_rows = max(ROW_ALIGN, target // row_bytes)
    tile_rows = (tile_rows // ROW_ALIGN) * ROW_ALIGN
    if rows <= tile_rows:
        # Whole slab in a single full-extent block (always a legal block shape);
        # no pointless 2-way split on single-TC chips.
        tile_rows = rows

    grid = (pl.cdiv(rows, tile_rows),)

    return pl.pallas_call(
        _make_copy_kernel(rows, tile_rows),
        out_shape=jax.ShapeDtypeStruct((rows, cols), x2d.dtype),
        grid_spec=pltpu.PrefetchScalarGridSpec(
            num_scalar_prefetch=0,
            grid=grid,
            # Raw HBM ref: no auto-DMA, no VMEM input buffers.
            in_specs=[pl.BlockSpec(memory_space=pl.ANY)],
            out_specs=pl.BlockSpec((tile_rows, cols), lambda i: (i, 0)),
            scratch_shapes=[pltpu.SemaphoreType.DMA],
        ),
        compiler_params=pltpu.CompilerParams(
            dimension_semantics=("parallel",),
            vmem_limit_bytes=32 * 1024 * 1024,
        ),
        cost_estimate=pl.CostEstimate(
            flops=0,
            transcendentals=0,
            bytes_accessed=2 * rows * cols * itemsize,
        ),
    )(x2d)


def _pick_lane_width(numel: int, in_last, out_last) -> int:
    """Lane-dense column width; prefer existing trailing dims so the wrapper
    reshapes stay layout-preserving (no hidden relayout passes over HBM)."""
    for d in (out_last, in_last):
        if d and d % LANE == 0 and d <= MAX_LANE_W and numel % d == 0:
            return d
    for w in (1024, 512, 256, 128):
        if numel % w == 0:
            return w
    return 0  # not lane-tileable


class View:
    """JAX/Pallas equivalent of the PyTorch View module.

    Default behaviour matches torch `.view`: a contiguous row-major reshape,
    which is metadata-only (no kernel, no HBM traffic).  Pass
    `materialize=True` to force a fresh buffer via the Pallas copy kernel.
    """

    def __init__(self, size, materialize: bool = False):
        self.size = tuple(size)
        self.materialize = materialize

    def _resolve_size(self, numel: int):
        size = list(self.size)
        if -1 in size:
            idx = size.index(-1)
            known = 1
            for j, s in enumerate(size):
                if j != idx:
                    known *= s
            if known == 0:
                raise ValueError("cannot infer -1 dimension with a zero-sized known dim")
            if numel % known != 0:
                raise ValueError("view size incompatible with input")
            size[idx] = numel // known
        if math.prod(size) != numel:
            raise ValueError("view size incompatible with input")
        return tuple(size)

    def __call__(self, tensor: jax.Array) -> jax.Array:
        numel = tensor.size
        out_size = self._resolve_size(numel)

        if not self.materialize:
            # Contiguous row-major view == free reshape (metadata-only).
            return tensor.reshape(out_size)

        if numel == 0:
            return tensor.reshape(out_size)

        in_last = tensor.shape[-1] if tensor.ndim >= 1 else None
        out_last = out_size[-1] if len(out_size) >= 1 else None
        lane_w = _pick_lane_width(numel, in_last, out_last)
        if lane_w == 0:
            # TODO(synk): element counts not divisible by 128 would need a
            # padded/masked copy kernel; fall back to the plain reshape.
            return tensor.reshape(out_size)

        flat = tensor.reshape(numel // lane_w, lane_w)  # row-major, like .view
        y2d = _pallas_copy_2d(flat)
        return y2d.reshape(out_size)


if __name__ == "__main__":
    key = jax.random.PRNGKey(0)
    # Typical VAE usage: flatten conv features before an FC layer.
    x = jax.random.normal(key, (2, 4, 16, 16), dtype=jnp.float32)  # NCHW
    ref = x.reshape(2, 4 * 16 * 16)

    # 1) Default path: metadata-only reshape (torch .view semantics, no copy).
    view = View((-1, 4 * 16 * 16))
    y = jax.block_until_ready(view(x))
    assert y.shape == (2, 1024) and y.dtype == x.dtype
    assert bool(jnp.array_equal(y, ref))

    # 2) Materialized path: direct-DMA Pallas copy kernel (single block).
    view_mat = View((-1, 4 * 16 * 16), materialize=True)
    y_mat = jax.block_until_ready(view_mat(x))
    assert y_mat.shape == (2, 1024) and y_mat.dtype == x.dtype
    assert bool(jnp.array_equal(y_mat, ref))

    # 3) Materialized path with a packed dtype (bf16).
    xb = x.astype(jnp.bfloat16)
    yb = jax.block_until_ready(View((2, -1), materialize=True)(xb))
    assert yb.shape == (2, 1024) and yb.dtype == jnp.bfloat16
    assert bool(jnp.array_equal(yb, xb.reshape(2, 1024)))

    # 4) Exercise the multi-tile grid + ragged last block with a small forced tile.
    x3 = jax.random.normal(jax.random.PRNGKey(0), (80, 256), dtype=jnp.float32)
    y3 = jax.block_until_ready(_pallas_copy_2d(x3, target_tile_bytes=32 * 1024))
    assert y3.shape == x3.shape and bool(jnp.array_equal(y3, x3))

    print("KERNEL_OK")
</pallas_src>

<mosaic_0001>
module attributes {stable_mosaic.version = 11 : i64} {
  func.func @kernel(%arg0: i32, %arg1: memref<2x1024xf32, #tpu.memory_space<any>>, %arg2: memref<2x1024xf32, #tpu.memory_space<vmem>>, %arg3: memref<!tpu.dma_semaphore, #tpu.memory_space<semaphore_mem>>) attributes {dimension_semantics = [#tpu.dimension_semantics<parallel>], iteration_bounds = array<i64: 1>, scalar_prefetch = 0 : i64, scratch_operands = 1 : i64, tpu.core_type = #tpu.core_type<tc>, window_params = [{}, {transform_indices = @transform_1, window_bounds = array<i64: 2, 1024>}]} {
    %c2_i32 = arith.constant 2 : i32
    %0 = arith.muli %arg0, %c2_i32 : i32
    %c0_i32 = arith.constant 0 : i32
    %1 = tpu.memref_slice %arg1[%0, %c0_i32] : memref<2x1024xf32, #tpu.memory_space<any>> -> memref<2x1024xf32, #tpu.memory_space<any>>
    %c0_i32_0 = arith.constant 0 : i32
    %c0_i32_1 = arith.constant 0 : i32
    %2 = tpu.memref_slice %arg2[%c0_i32_0, %c0_i32_1] : memref<2x1024xf32, #tpu.memory_space<vmem>> -> memref<2x1024xf32, #tpu.memory_space<vmem>>
    tpu.enqueue_dma source(%1 : memref<2x1024xf32, #tpu.memory_space<any>>) target(%2 : memref<2x1024xf32, #tpu.memory_space<vmem>>) target_semaphore(%arg3 : memref<!tpu.dma_semaphore, #tpu.memory_space<semaphore_mem>>)
    %c0_i32_2 = arith.constant 0 : i32
    %3 = tpu.memref_slice %arg1[%0, %c0_i32_2] : memref<2x1024xf32, #tpu.memory_space<any>> -> memref<2x1024xf32, #tpu.memory_space<any>>
    %c0_i32_3 = arith.constant 0 : i32
    %c0_i32_4 = arith.constant 0 : i32
    %4 = tpu.memref_slice %arg2[%c0_i32_3, %c0_i32_4] : memref<2x1024xf32, #tpu.memory_space<vmem>> -> memref<2x1024xf32, #tpu.memory_space<vmem>>
    tpu.wait_dma2 semaphore(%arg3 : memref<!tpu.dma_semaphore, #tpu.memory_space<semaphore_mem>>) src(%3 : memref<2x1024xf32, #tpu.memory_space<any>>) dst(%4 : memref<2x1024xf32, #tpu.memory_space<vmem>>)
    return
  }
  func.func @transform_1(%arg0: i32) -> (i32, i32) {
    %c0_i32 = arith.constant 0 : i32
    %c0_i32_0 = arith.constant 0 : i32
    return %arg0, %c0_i32 : i32, i32
  }
}

</mosaic_0001>

<llo_original>
// kernel: tpu_custom_call.1
$region0: #{tpu_custom_call.1}
  #allocation0 [shape = 'u32[]', space=smem, size = 0x4, offset = 0x4, fixed_abs, tag = 'smem constant byte address 0x4 - core index']
  #allocation1 [shape = 'u32[144,128]{1,0:T(1,128)}', space=vmem, size = 0x12000, scoped, tag = 'internal scratch']
  #allocation2 [shape = 's32[1]{0}', space=sflag, size = 0x4, scoped, tag = 'scratch operand']
  #allocation5 [shape = 's32[]', space=sflag, size = 0x4, offset = 0, fixed_abs, tag = 'sflag constant byte address 0x0 - dummy sync flag']
  #allocation6 [shape = 's32[]', space=sflag, size = 0x4, offset = 0, fixed_abs, tag = 'sflag constant byte address 0x0 - dummy sync flag']
  #allocation7 [shape = 'u32[]', space=smem, size = 0x4, offset = 0x44, fixed_abs, tag = 'smem constant byte address 0x44 - assertion arg 0']
  #allocation8 [shape = 'u32[]', space=smem, size = 0x4, offset = 0x48, fixed_abs, tag = 'smem constant byte address 0x48 - assertion arg 1']
  %s0 = inlined_call_operand.hbm [shape: f32[2,1024], index: 0, kind: input, shape index: {}]
  %s1 = inlined_call_operand.hbm [shape: f32[2,1024], index: 1, kind: output, shape index: {}]
  %s2 = sld [smem:[#allocation0]]
  $region14: #{tpu_custom_call.1} parent=0
    _
  %s4 = ssub.s32 1, %s2
  %s5 = scalar_select 0, %s4, %s2
  $region1: #{tpu_custom_call.1} parent=0
    #allocation3 [shape = 'u8[8192]{0}', space=vmem, size = 0x2000, scoped, tag = 'output window, operand 0, single buffered']
    #allocation4 [shape = 's32[1]{0}', space=sflag, size = 0x4, scoped, tag = 'scoped memory for tpu_custom_call.1']
    %6 = vsyncpa [#allocation4], 0
    %s7 = smul.u32 0, 2
    %s8 = sshra.s32 %s7, 1
    %s9 = sand.u32 %s7, 1
    %s10 = smul.u32 %s8, 8
    %s11 = smul.addr %s10, 32
    %s12 = scalar_lea.hbm %s0, %s11
    // Predicated region
    $region2: #{tpu_custom_call.1} parent=1 // pred_check
      _
    $region3: #{tpu_custom_call.1} parent=1 // pred_check_branch
      %14 = sbr.rel target = $region5
    $region4: #{tpu_custom_call.1} parent=1 // pred_region
      %15 = sst [smem:[#allocation7]] [#allocation6]
      %16 = sst [smem:[#allocation8]] [#allocation5]
    $region5: #{tpu_custom_call.1} parent=1 // pred_fallthru
      _
    %18 = shalt.err (0)
    %s20 = sshll.u32 [#allocation3], 4
    %s21 = int_to_ptr.vmem [resolvable:$true] %s20
    %23 = dma.hbm_to_vmem [thread:$0]  %s12, 256, %s21, [#allocation2]
    %s24 = smul.u32 2, 1
    %s25 = smul.u32 %s24, 8
    %s26 = sshll.u32 %s25, 4
    %27 = dma.done [#allocation2], %s26
    // Predicated region
    $region6: #{tpu_custom_call.1} parent=1 // pred_check
      _
    $region7: #{tpu_custom_call.1} parent=1 // pred_check_branch
      %29 = sbr.rel (0) target = $region9
    $region8: #{tpu_custom_call.1} parent=1 // pred_region
      %s31 = ssub.s32 256, 256
      %32 = vsyncadd [#allocation4], %s31
      %s34 = sshll.u32 [#allocation3], 4
      %s35 = int_to_ptr.vmem [resolvable:$true] %s34
      %37 = dma.vmem_to_hbm [thread:$0]  %s35, 256, %s1, [#allocation4]
    $region9: #{tpu_custom_call.1} parent=1 // pred_fallthru
      _
    // Predicated region
    $region10: #{tpu_custom_call.1} parent=1 // pred_check
      _
    $region11: #{tpu_custom_call.1} parent=1 // pred_check_branch
      %39 = sbr.rel (0) target = $region13
    $region12: #{tpu_custom_call.1} parent=1 // pred_region
      %40 = dma.done [#allocation4], 256
    $region13: #{tpu_custom_call.1} parent=1 // pred_fallthru
      _
    %41 = vsyncpa [#allocation4], 1
  %42 = vsyncmov [#allocation2]
  %s43 = vpop.sfrf %42
  %p44 = scmp.eq.s32.totalorder %s43, 0
  %p45 = pneg %p44
  %47 = shalt.err (%p45)

</llo_original>
